<compile_context>
chip_gen: v7x
topology: tpu7x:2x2x1
jax: 0.10.0
libtpu: 0.0.40
codegen_flags: <defaults>
</compile_context>

<pallas_src>
import jax
import jax.numpy as jnp
from jax.experimental import pallas as pl
from jax.experimental.pallas import tpu as pltpu

IN_FEATURES = 128
OUT_FEATURES = 10
LANE = 128  # VMEM lane width: (tb, 10) blocks are lane-padded to (tb, 128).


def _round_up(n: int, m: int) -> int:
    return ((n + m - 1) // m) * m


def _classifier_head_kernel(x_ref, w_ref, b_ref, o_ref):
    # VPU: ReLU only (SoftDropout eval-mode scale is pre-folded into w).
    h = jnp.maximum(x_ref[...], 0.0)
    # MXU: (TILE_B, 128) @ (128, 10) with f32 accumulation + bias broadcast.
    o_ref[...] = (
        jnp.dot(h, w_ref[...], preferred_element_type=jnp.float32)
        + b_ref[...]
    ).astype(o_ref.dtype)


def classifier_head_forward(x, w, b, *, tile_b: int = 16384):
    """x: (B, 128) f32 or bf16; w: (128, 10); b: (1, 10). Returns (B, 10) f32.

    Note: the SoftDropout eval-mode scale is 1 / numel(x) = 1/(B*128), so the
    output magnitude depends on the *true* batch size exactly as in PyTorch
    (and a distinct B forces a re-trace).  Do not call this with a padded or
    bucketed batch unless that is intended.
    """
    B, D = x.shape
    assert D == IN_FEATURES, f"expected {IN_FEATURES} input features, got {D}"

    # SoftDropout (eval): sum of 5 identity copies / (5 * numel(x)) == x / numel(x).
    # Fold the static, positive scale into the weight (commutes through ReLU
    # and the linear layer; differs from the reference only by f32 rounding).
    scale = 1.0 / float(B * D)
    # Follow the activation dtype for the weight so bf16 activations halve the
    # streamed HBM bytes; MXU still accumulates in f32.
    w_scaled = (w.astype(jnp.float32) * scale).astype(x.dtype)
    b = b.astype(jnp.float32)

    # Batch tile: large enough that the ~0.35 us per-grid-step overhead is a
    # few % of per-tile DMA time on every generation; clamped (8-aligned) for
    # small batches.
    tb = min(tile_b, _round_up(B, 8))
    grid = (pl.cdiv(B, tb),)

    # VMEM footprint (worst case, everything double-buffered):
    #   x tiles  : 2 * tb * 128 * itemsize(x)
    #   out tiles: 2 * tb * 128 * 4        (lane-padded from 10 -> 128, f32)
    #   w, b     : resident, < 128 KiB
    x_buf = tb * LANE * jnp.dtype(x.dtype).itemsize
    out_buf = tb * LANE * 4
    resident = 2 * (IN_FEATURES * LANE * 4)  # generous bound for w/b copies
    footprint = 2 * x_buf + 2 * out_buf + resident
    # +4 MiB headroom for compiler-internal scratch; floor at 16 MiB.
    vmem_limit = max(footprint + (4 << 20), 16 << 20)

    grid_spec = pl.GridSpec(
        grid=grid,
        in_specs=[
            pl.BlockSpec((tb, D), lambda i: (i, 0)),              # x: streamed per tile
            pl.BlockSpec((D, OUT_FEATURES), lambda i: (0, 0)),    # w: VMEM-resident
            pl.BlockSpec((1, OUT_FEATURES), lambda i: (0, 0)),    # b: VMEM-resident
        ],
        out_specs=pl.BlockSpec((tb, OUT_FEATURES), lambda i: (i, 0)),
    )

    cost = pl.CostEstimate(
        flops=2 * B * D * OUT_FEATURES,
        transcendentals=0,
        bytes_accessed=(
            B * D * jnp.dtype(x.dtype).itemsize          # x read
            + B * OUT_FEATURES * 4                        # out write
            + D * OUT_FEATURES * jnp.dtype(x.dtype).itemsize  # w read
            + OUT_FEATURES * 4                            # b read
        ),
    )

    return pl.pallas_call(
        _classifier_head_kernel,
        out_shape=jax.ShapeDtypeStruct((B, OUT_FEATURES), jnp.float32),
        grid_spec=grid_spec,
        cost_estimate=cost,
        compiler_params=pltpu.CompilerParams(
            # No cross-grid reduction; "parallel" lets v7x's 2 TCs split tiles
            # (no-op on single-TC v5e/v6e).
            dimension_semantics=("parallel",),
            vmem_limit_bytes=vmem_limit,
        ),
    )(x, w_scaled, b)


def reference_forward(x, w, b):
    """Pure-JAX reference of the PyTorch eval-mode forward."""
    h = jnp.maximum(x, 0.0)
    h = (5.0 * h) / (5.0 * x.size)  # SoftDropout eval
    return h @ w + b


if __name__ == "__main__":
    key = jax.random.PRNGKey(0)
    kx, kw, kb = jax.random.split(key, 3)

    B = 8  # small test batch
    x = jax.random.normal(kx, (B, IN_FEATURES), dtype=jnp.float32)

    # Deterministic parameter init (shapes from nn.Linear(128, 10)),
    # mimicking PyTorch's uniform(-1/sqrt(fan_in), 1/sqrt(fan_in)).
    bound = 1.0 / (IN_FEATURES ** 0.5)
    w = jax.random.uniform(
        kw, (IN_FEATURES, OUT_FEATURES), minval=-bound, maxval=bound,
        dtype=jnp.float32)
    b = jax.random.uniform(
        kb, (1, OUT_FEATURES), minval=-bound, maxval=bound, dtype=jnp.float32)

    out = classifier_head_forward(x, w, b)
    out = jax.block_until_ready(out)

    ref = reference_forward(x, w, b)
    assert out.shape == (B, OUT_FEATURES)
    # Tolerance slightly loosened vs last-ulp: folding the scale into w
    # reorders the multiply relative to the reference (identical up to f32
    # rounding).
    assert jnp.allclose(out, ref, atol=1e-5, rtol=1e-4), "mismatch vs reference"

    print("KERNEL_OK")
</pallas_src>

<mosaic_0001>
module attributes {stable_mosaic.version = 11 : i64} {
  func.func @_classifier_head_kernel(%arg0: i32, %arg1: memref<8x128xf32, #tpu.memory_space<vmem>>, %arg2: memref<128x10xf32, #tpu.memory_space<vmem>>, %arg3: memref<1x10xf32, #tpu.memory_space<vmem>>, %arg4: memref<8x10xf32, #tpu.memory_space<vmem>>) attributes {dimension_semantics = [#tpu.dimension_semantics<parallel>], iteration_bounds = array<i64: 1>, scalar_prefetch = 0 : i64, scratch_operands = 0 : i64, tpu.core_type = #tpu.core_type<tc>, window_params = [{transform_indices = @transform_0, window_bounds = array<i64: 8, 128>}, {pipeline_mode = #tpu.pipeline_mode<synchronous>, transform_indices = @transform_1, window_bounds = array<i64: 128, 10>}, {pipeline_mode = #tpu.pipeline_mode<synchronous>, transform_indices = @transform_2, window_bounds = array<i64: 1, 10>}, {transform_indices = @transform_3, window_bounds = array<i64: 8, 10>}]} {
    %c0 = arith.constant 0 : index
    %c0_0 = arith.constant 0 : index
    %0 = vector.load %arg1[%c0, %c0_0] : memref<8x128xf32, #tpu.memory_space<vmem>>, vector<8x128xf32>
    %cst = arith.constant 0.000000e+00 : f32
    %1 = vector.broadcast %cst : f32 to vector<8x128xf32>
    %2 = arith.maximumf %0, %1 : vector<8x128xf32>
    %c0_1 = arith.constant 0 : index
    %c0_2 = arith.constant 0 : index
    %3 = vector.load %arg2[%c0_1, %c0_2] : memref<128x10xf32, #tpu.memory_space<vmem>>, vector<128x10xf32>
    %cst_3 = arith.constant dense<0.000000e+00> : vector<8x10xf32>
    %4 = tpu.matmul %2, %3, %cst_3 {dimension_numbers = #tpu.dot_dimension_numbers<[1], [0], [0], [1], [0, 0, 1, 1], [], []>} : vector<8x128xf32>, vector<128x10xf32>, vector<8x10xf32> -> vector<8x10xf32>
    %c0_4 = arith.constant 0 : index
    %c0_5 = arith.constant 0 : index
    %5 = vector.load %arg3[%c0_4, %c0_5] : memref<1x10xf32, #tpu.memory_space<vmem>>, vector<1x10xf32>
    %6 = vector.broadcast %5 : vector<1x10xf32> to vector<8x10xf32>
    %7 = arith.addf %4, %6 : vector<8x10xf32>
    %c0_6 = arith.constant 0 : index
    %c0_7 = arith.constant 0 : index
    %8 = vector.load %arg4[%c0_6, %c0_7] : memref<8x10xf32, #tpu.memory_space<vmem>>, vector<8x10xf32>
    tpu.vector_store %arg4[%c0_6, %c0_7], %7 {strides = array<i32>} : memref<8x10xf32, #tpu.memory_space<vmem>>, vector<8x10xf32>,
    return
  }
  func.func @transform_0(%arg0: i32) -> (i32, i32) {
    %c0_i32 = arith.constant 0 : i32
    %c0_i32_0 = arith.constant 0 : i32
    return %arg0, %c0_i32 : i32, i32
  }
  func.func @transform_1(%arg0: i32) -> (i32, i32) {
    %c0_i32 = arith.constant 0 : i32
    %c0_i32_0 = arith.constant 0 : i32
    %c0_i32_1 = arith.constant 0 : i32
    return %c0_i32, %c0_i32_0 : i32, i32
  }
  func.func @transform_2(%arg0: i32) -> (i32, i32) {
    %c0_i32 = arith.constant 0 : i32
    %c0_i32_0 = arith.constant 0 : i32
    %c0_i32_1 = arith.constant 0 : i32
    return %c0_i32, %c0_i32_0 : i32, i32
  }
  func.func @transform_3(%arg0: i32) -> (i32, i32) {
    %c0_i32 = arith.constant 0 : i32
    %c0_i32_0 = arith.constant 0 : i32
    return %arg0, %c0_i32 : i32, i32
  }
}

</mosaic_0001>

<llo_original>
// kernel: tpu_custom_call.1
$region0: #{tpu_custom_call.1}
  #allocation0 [shape = 'u32[]', space=smem, size = 0x4, offset = 0x4, fixed_abs, tag = 'smem constant byte address 0x4 - core index']
  #allocation1 [shape = 'u32[144,128]{1,0:T(1,128)}', space=vmem, size = 0x12000, scoped, tag = 'internal scratch']
  %s0 = inlined_call_operand.vmem [shape: f32[8,128], index: 0, kind: input, shape index: {}]
  %s1 = inlined_call_operand.vmem [shape: f32[128,10], index: 1, kind: input, shape index: {}]
  %s2 = inlined_call_operand.vmem [shape: f32[1,10], index: 2, kind: input, shape index: {}]
  %s3 = inlined_call_operand.hbm [shape: f32[8,10], index: 3, kind: output, shape index: {}]
  %s4 = sld [smem:[#allocation0]]
  $region22: #{tpu_custom_call.1} parent=0
    _
  %s6 = ssub.s32 1, %s4
  %s7 = scalar_select 0, %s6, %s4
  $region1: #{tpu_custom_call.1} parent=0
    #allocation2 [shape = 'u8[4096]{0}', space=vmem, size = 0x1000, scoped, tag = 'output window, operand 0, single buffered']
    #allocation3 [shape = 's32[1]{0}', space=sflag, size = 0x4, scoped, tag = 'scoped memory for tpu_custom_call.1']
    %8 = vsyncpa [#allocation3], 0
    // Predicated region
    $region2: #{tpu_custom_call.1} parent=1 // pred_check
      _
    $region3: #{tpu_custom_call.1} parent=1 // pred_check_branch
      %10 = sbr.rel (0) target = $region5
    $region4: #{tpu_custom_call.1} parent=1 // pred_region
      _
    $region5: #{tpu_custom_call.1} parent=1 // pred_fallthru
      _
    // Predicated region
    $region6: #{tpu_custom_call.1} parent=1 // pred_check
      _
    $region7: #{tpu_custom_call.1} parent=1 // pred_check_branch
      %12 = sbr.rel (0) target = $region9
    $region8: #{tpu_custom_call.1} parent=1 // pred_region
      _
    $region9: #{tpu_custom_call.1} parent=1 // pred_fallthru
      _
    // Predicated region
    $region10: #{tpu_custom_call.1} parent=1 // pred_check
      _
    $region11: #{tpu_custom_call.1} parent=1 // pred_check_branch
      %14 = sbr.rel (0) target = $region13
    $region12: #{tpu_custom_call.1} parent=1 // pred_region
      _
    $region13: #{tpu_custom_call.1} parent=1 // pred_fallthru
      _
    %v15 = vld [vmem:[%s0] sm:$0xff]
    %v16 = vmax.f32 %v15, 0.0
    %v17 = vld [vmem:[%s1] sm:$0xff]
    %v18 = vld [vmem:[%s1 + $0x8] sm:$0xff]
    %v19 = vld [vmem:[%s1 + $0x10] sm:$0xff]
    %v20 = vld [vmem:[%s1 + $0x18] sm:$0xff]
    %v21 = vld [vmem:[%s1 + $0x20] sm:$0xff]
    %v22 = vld [vmem:[%s1 + $0x28] sm:$0xff]
    %v23 = vld [vmem:[%s1 + $0x30] sm:$0xff]
    %v24 = vld [vmem:[%s1 + $0x38] sm:$0xff]
    %v25 = vld [vmem:[%s1 + $0x40] sm:$0xff]
    %v26 = vld [vmem:[%s1 + $0x48] sm:$0xff]
    %v27 = vld [vmem:[%s1 + $0x50] sm:$0xff]
    %v28 = vld [vmem:[%s1 + $0x58] sm:$0xff]
    %v29 = vld [vmem:[%s1 + $0x60] sm:$0xff]
    %v30 = vld [vmem:[%s1 + $0x68] sm:$0xff]
    %v31 = vld [vmem:[%s1 + $0x70] sm:$0xff]
    %v32 = vld [vmem:[%s1 + $0x78] sm:$0xff]
    %v33 = vld [vmem:[%s2] sm:$0x1]
    %v35 = vlaneseq
    %v36 = vshrl.u32 %v35, 7
    %v37 = vsub.s32 0, %v36
    %v38 = vrot.slane %v33, %v37
    %40 = vmatprep.subr.mxu0 0.0
    %41 = vmatpush1.msra.mxu0 %v17
    %42 = vmatprep.subr.mxu0 0.0
    %43 = vmatpush1.msra.mxu0 %v18
    %44 = vmatprep.subr.mxu0 0.0
    %45 = vmatpush1.msra.mxu0 %v19
    %46 = vmatprep.subr.mxu0 0.0
    %47 = vmatpush1.msra.mxu0 %v20
    %48 = vmatprep.subr.mxu0 0.0
    %49 = vmatpush1.msra.mxu0 %v21
    %50 = vmatprep.subr.mxu0 0.0
    %51 = vmatpush1.msra.mxu0 %v22
    %52 = vmatprep.subr.mxu0 0.0
    %53 = vmatpush1.msra.mxu0 %v23
    %54 = vmatprep.subr.mxu0 0.0
    %55 = vmatpush1.msra.mxu0 %v24
    %56 = vmatprep.subr.mxu0 0.0
    %57 = vmatpush1.msra.mxu0 %v25
    %58 = vmatprep.subr.mxu0 0.0
    %59 = vmatpush1.msra.mxu0 %v26
    %60 = vmatprep.subr.mxu0 0.0
    %61 = vmatpush1.msra.mxu0 %v27
    %62 = vmatprep.subr.mxu0 0.0
    %63 = vmatpush1.msra.mxu0 %v28
    %64 = vmatprep.subr.mxu0 0.0
    %65 = vmatpush1.msra.mxu0 %v29
    %66 = vmatprep.subr.mxu0 0.0
    %67 = vmatpush1.msra.mxu0 %v30
    %68 = vmatprep.subr.mxu0 0.0
    %69 = vmatpush1.msra.mxu0 %v31
    %70 = vmatprep.subr.mxu0 0.0
    %71 = vmatpush1.msra.mxu0 %v32
    %72 = vmatprep.subr.mxu0 0.0
    %73 = vmatpush1.msra.mxu0 0.0
    %74 = vmatprep.subr.mxu0 0.0
    %75 = vmatpush1.msra.mxu0 0.0
    %76 = vmatprep.subr.mxu0 0.0
    %77 = vmatpush1.msra.mxu0 0.0
    %78 = vmatprep.subr.mxu0 0.0
    %79 = vmatpush1.msra.mxu0 0.0
    %80 = vmatprep.subr.mxu0 0.0
    %81 = vmatpush1.msra.mxu0 0.0
    %82 = vmatprep.subr.mxu0 0.0
    %83 = vmatpush1.msra.mxu0 0.0
    %84 = vmatprep.subr.mxu0 0.0
    %85 = vmatpush1.msra.mxu0 0.0
    %86 = vmatprep.subr.mxu0 0.0
    %87 = vmatpush1.msra.mxu0 0.0
    %88 = vmatprep.subr.mxu0 0.0
    %89 = vmatpush1.msra.mxu0 0.0
    %90 = vmatprep.subr.mxu0 0.0
    %91 = vmatpush1.msra.mxu0 0.0
    %92 = vmatprep.subr.mxu0 0.0
    %93 = vmatpush1.msra.mxu0 0.0
    %94 = vmatprep.subr.mxu0 0.0
    %95 = vmatpush1.msra.mxu0 0.0
    %96 = vmatprep.subr.mxu0 0.0
    %97 = vmatpush1.msra.mxu0 0.0
    %98 = vmatprep.subr.mxu0 0.0
    %99 = vmatpush1.msra.mxu0 0.0
    %100 = vmatprep.subr.mxu0 0.0
    %101 = vmatpush1.msra.mxu0 0.0
    %102 = vmatprep.subr.mxu0 0.0
    %103 = vmatpush1.msra.mxu0 0.0
    %104 = vmatprep.mubr.f32.mxu0 0.0
    %105 = vmatmul.mubr.f32.gmra.mrb[0].mxu0 %v16
    %v106 = vpop.f32.mrb[0].mxu0
    %v107 = vadd.f32 %v38, %v106
    %v108 = vpop.f32.mrb[0].mxu0
    %109 = vdwg.mxu0
    %vm110 = vcmask 80896
    %111 = vst.msk [vmem:[#allocation2] sm:$0xff] %vm110, %v107
    // Predicated region
    $region14: #{tpu_custom_call.1} parent=1 // pred_check
      _
    $region15: #{tpu_custom_call.1} parent=1 // pred_check_branch
      %113 = sbr.rel (0) target = $region17
    $region16: #{tpu_custom_call.1} parent=1 // pred_region
      %s115 = ssub.s32 128, 128
      %116 = vsyncadd [#allocation3], %s115
      %s118 = sshll.u32 [#allocation2], 4
      %s119 = int_to_ptr.vmem [resolvable:$true] %s118
      %121 = dma.vmem_to_hbm [thread:$0]  %s119, 128, %s3, [#allocation3]
    $region17: #{tpu_custom_call.1} parent=1 // pred_fallthru
      _
    // Predicated region
    $region18: #{tpu_custom_call.1} parent=1 // pred_check
      _
    $region19: #{tpu_custom_call.1} parent=1 // pred_check_branch
      %123 = sbr.rel (0) target = $region21
    $region20: #{tpu_custom_call.1} parent=1 // pred_region
      %124 = dma.done [#allocation3], 128
    $region21: #{tpu_custom_call.1} parent=1 // pred_fallthru
      _
    %125 = vsyncpa [#allocation3], 1

</llo_original>
